<compile_context>
chip_gen: v5e
topology: v5e:2x2
jax: 0.10.0
libtpu: 0.0.40
codegen_flags: <defaults>
</compile_context>

<pallas_src>
import functools
import math

import jax
import jax.numpy as jnp
from jax.experimental import pallas as pl
from jax.experimental.pallas import tpu as pltpu

_LANES = 128


def _round_up(v, m):
    return ((v + m - 1) // m) * m


def _tpu_vmem_capacity():
    """Physical VMEM bytes per TensorCore; conservative 64 MiB (v7x) fallback."""
    try:
        info = pltpu.get_tpu_info()
        cap = int(getattr(info, "vmem_capacity_bytes", 0) or 0)
        if cap > 0:
            return cap
    except Exception:
        pass
    return 64 << 20


def _d_tile_candidates(d):
    """Divisors of d that are multiples of 128 (plus d itself), descending."""
    cands = {d}
    m = _LANES
    while m < d:
        if d % m == 0:
            cands.add(m)
        m += _LANES
    return sorted(cands, reverse=True)


def _choose_tiles(n, d, elem_bytes, requested_tn=None):
    """Pick (row_tile, d_tile, vmem_limit_bytes) for the bandwidth-bound kernel."""
    vmem_cap = _tpu_vmem_capacity()
    small_vmem = vmem_cap <= (64 << 20)      # v7x-like part (64 MiB / TC, 2 TCs)

    # Budget for the double-buffered x + x_feas blocks (2 inputs x 2 buffers).
    budget = (20 << 20) if small_vmem else (32 << 20)
    budget = min(budget, vmem_cap // 2)

    n_pad = _round_up(max(n, 1), _LANES)

    def max_tn_for(td):
        t = budget // (4 * td * elem_bytes)
        return (t // _LANES) * _LANES

    # D tile: whole D unless that forces the row tile below ~512 rows; then the
    # largest 128-multiple exact divisor of D that restores tn >= 512 (exact
    # divisors only — a ragged D tail would leak garbage into the reduction).
    td = d
    if max_tn_for(d) < 512:
        cands = _d_tile_candidates(d)
        for cand in cands:
            if max_tn_for(cand) >= 512:
                td = cand
                break
        else:
            td = cands[-1]                   # smallest candidate => most D chunks

    tn = min(16384, max(_LANES, max_tn_for(td)))
    if requested_tn is not None:
        req = max(_LANES, _round_up(int(requested_tn), _LANES))
        tn = min(req, tn)                    # clamp user tn against the VMEM budget
    tn = min(tn, n_pad)
    if small_vmem and n_pad > _LANES:
        # v7x megacore: >= ~4 roughly equal row tiles so both TensorCores get
        # balanced work on the "parallel" axis.  On 1-TC chips splitting only
        # adds per-step overhead, so skip it there.
        tn = min(tn, max(_LANES, _round_up(pl.cdiv(n_pad, 4), _LANES)))
    tn = max(tn, _LANES)

    # VMEM limit: actual block footprint + headroom, capped below physical.
    block_bytes = 4 * tn * td * elem_bytes               # x + x_feas, double-buffered
    misc_bytes = (2 + 1 + 2) * tn * 4 * 2 + 8 * tn * 4   # u/L/g blocks + c^2 scratch
    default_limit = (40 << 20) if small_vmem else (64 << 20)
    vmem_limit = max(default_limit, block_bytes + misc_bytes + (4 << 20))
    vmem_limit = int(min(vmem_limit, int(0.9 * vmem_cap)))
    return tn, td, vmem_limit


def _pessimistic_likelihood_kernel(u_ref, x_ref, xf_ref, L_ref, g_ref, c2_ref,
                                   *, epsilon_pe, sigma, p, zeta):
    dk = pl.program_id(1)

    @pl.when(dk == 0)
    def _():
        c2_ref[...] = jnp.zeros_like(c2_ref)

    # ---- HBM-bound hot path: partial per-row squared distance ---------------
    # Inputs stay in their caller dtype (f32 or bf16) all the way into VMEM;
    # the upcast after the load is hidden under the DMA.
    diff = x_ref[...].astype(jnp.float32) - xf_ref[...].astype(jnp.float32)
    diff2 = diff * diff
    # Row-sum on the (otherwise idle) MXU: ones(8, td) @ diff2^T yields the
    # partial sums already lane-dense as (8, tn) rows (all 8 identical) — no
    # sublane->lane relayout; the single-row slice happens once at finalize.
    ones = jnp.ones((8, diff2.shape[-1]), jnp.float32)
    c2_ref[...] += jax.lax.dot_general(
        ones, diff2,
        dimension_numbers=(((1,), (1,)), ((), ())),        # contract over D-chunk
        preferred_element_type=jnp.float32)

    # ---- finalize: lane-dense scalar tail + unmasked row stores --------------
    @pl.when(dk == pl.num_programs(1) - 1)
    def _():
        c2 = c2_ref[0:1, :]                                 # (1, tn)
        c = jnp.sqrt(c2)

        # u arrives transposed: (2, tn) block, rows are lane-dense u0 / u1.
        u0 = u_ref[0:1, :]                                  # (1, tn)
        u1 = u_ref[1:2, :]                                  # (1, tn)

        sqrt_p = math.sqrt(p)
        d = u1 + sigma
        f = jnp.sqrt((zeta + epsilon_pe * epsilon_pe - p * u0 * u0 - u1 * u1)
                     * (1.0 / (p - 1.0)))
        num = c + sqrt_p * u0

        # EUP approx reciprocals + one Newton step each: the divide leaves the
        # VPU critical path while the refinement keeps the compounded d^-3 term
        # in g1 far inside the 5e-3 relative tolerance.
        inv_d = pl.reciprocal(d, approx=True)
        inv_d = inv_d * (2.0 - d * inv_d)
        ffs = f * (f + sigma)
        inv_ffs = pl.reciprocal(ffs, approx=True)
        inv_ffs = inv_ffs * (2.0 - ffs * inv_ffs)
        inv_d2 = inv_d * inv_d

        # ---- likelihood -------------------------------------------------------
        L_ref[...] = (-jnp.log(d)
                      - 0.5 * (num * num) * inv_d2
                      - (p - 1.0) * jnp.log(f + sigma))

        # ---- gradient wrt u: two plain lane-dense row stores -------------------
        g_ref[0:1, :] = -sqrt_p * num * inv_d2 - (p * u0) * inv_ffs
        g_ref[1:2, :] = -inv_d + (num * num) * (inv_d2 * inv_d) + u1 * inv_ffs


def pessimistic_likelihood_forward(u, x, x_feas, *, epsilon_pe, sigma, x_dim,
                                   zeta=1e-6, tn=None):
    """Returns (L [N], u_grad [N, 2]) matching PessimisticLikelihood.forward.

    x / x_feas may be float32 or bfloat16; they are streamed in their native
    dtype (no wrapper cast pass) and upcast to f32 inside the kernel.
    """
    n, d_feat = x.shape
    assert u.shape == (n, 2) and x_feas.shape == (n, d_feat)
    assert x.dtype == x_feas.dtype

    elem_bytes = jnp.dtype(x.dtype).itemsize
    u_t = u.astype(jnp.float32).T                          # (2, N), lane-dense rows

    tn, td, vmem_limit = _choose_tiles(n, d_feat, elem_bytes, requested_tn=tn)

    # No HBM padding of the big inputs (would roughly double traffic for this
    # bandwidth-bound kernel): ragged row tails are partial blocks whose garbage
    # lanes >= n are sliced off below (safe: every op after the per-row MXU
    # reduction is lane-local).  Only tiny inputs (n < one tile) get padded.
    if n < tn:
        pad = tn - n
        x = jnp.pad(x, ((0, pad), (0, 0)))
        x_feas = jnp.pad(x_feas, ((0, pad), (0, 0)))
        u_t = jnp.pad(u_t, ((0, 0), (0, pad)))

    n_rows = max(n, tn)
    n_tiles = pl.cdiv(n_rows, tn)
    d_tiles = d_feat // td
    n_slab = n_tiles * tn

    kernel = functools.partial(
        _pessimistic_likelihood_kernel,
        epsilon_pe=float(epsilon_pe), sigma=float(sigma),
        p=float(x_dim), zeta=float(zeta))

    cost = pl.CostEstimate(
        flops=4 * n * d_feat + 32 * n,
        transcendentals=6 * n,
        bytes_accessed=2 * n * d_feat * elem_bytes + 20 * n)

    L_slab, g_slab = pl.pallas_call(
        kernel,
        out_shape=(jax.ShapeDtypeStruct((1, n_slab), jnp.float32),
                   jax.ShapeDtypeStruct((2, n_slab), jnp.float32)),
        grid_spec=pltpu.PrefetchScalarGridSpec(
            num_scalar_prefetch=0,
            grid=(n_tiles, d_tiles),                       # reduction axis last
            in_specs=[
                pl.BlockSpec((2, tn), lambda i, k: (0, i)),     # u^T
                pl.BlockSpec((tn, td), lambda i, k: (i, k)),    # x
                pl.BlockSpec((tn, td), lambda i, k: (i, k)),    # x_feas
            ],
            out_specs=(
                pl.BlockSpec((1, tn), lambda i, k: (0, i)),     # L slab
                pl.BlockSpec((2, tn), lambda i, k: (0, i)),     # u_grad slab
            ),
            scratch_shapes=[pltpu.VMEM((8, tn), jnp.float32)]), # c^2 accumulator
        compiler_params=pltpu.CompilerParams(
            dimension_semantics=("parallel", "arbitrary"),
            vmem_limit_bytes=vmem_limit),
        cost_estimate=cost,
    )(u_t, x, x_feas)

    return L_slab[0, :n], jnp.transpose(g_slab[:, :n])


def _reference_forward(u, x, x_feas, *, epsilon_pe, sigma, x_dim, zeta=1e-6):
    """Pure-JAX transcription of the PyTorch forward for verification."""
    c = jnp.linalg.norm(x - x_feas, axis=-1)
    d = u[..., 1] + sigma
    p = jnp.float32(x_dim)
    sqrt_p = jnp.sqrt(p)
    f = jnp.sqrt((zeta + epsilon_pe ** 2 - p * u[..., 0] ** 2 - u[..., 1] ** 2)
                 / (p - 1))
    L = (-jnp.log(d) - (c + sqrt_p * u[..., 0]) ** 2 / (2 * d ** 2)
         - (p - 1) * jnp.log(f + sigma))
    g0 = -sqrt_p * (c + sqrt_p * u[..., 0]) / d ** 2 \
         - p * u[..., 0] / (f * (f + sigma))
    g1 = -1 / d + (c + sqrt_p * u[..., 0]) ** 2 / d ** 3 \
         + u[..., 1] / (f * (f + sigma))
    return L, jnp.stack([g0, g1], axis=-1)


if __name__ == "__main__":
    # Small deterministic example: N samples of dimension D, duals u [N, 2].
    # N = 200 exercises both a full row tile and a ragged partial tile.
    N, D = 200, 32
    epsilon_pe = 0.5     # self.epsilon_pe (scalar)
    sigma = 0.1          # self.sigma      (scalar)
    x_dim = float(D)     # self.x_dim      (scalar, = feature dimension)

    key = jax.random.PRNGKey(0)
    k_u, k_x, k_xf = jax.random.split(key, 3)
    # Keep u small so the sqrt argument in f stays positive (as it would be
    # after the module's L2-ball projection onto radius eps/sqrt(p)).
    u = 0.01 * jax.random.uniform(k_u, (N, 2), dtype=jnp.float32)
    x = jax.random.normal(k_x, (N, D), dtype=jnp.float32)
    x_feas = jax.random.normal(k_xf, (N, D), dtype=jnp.float32)

    # ---- float32 path --------------------------------------------------------
    L, u_grad = pessimistic_likelihood_forward(
        u, x, x_feas, epsilon_pe=epsilon_pe, sigma=sigma, x_dim=x_dim)
    jax.block_until_ready((L, u_grad))

    L_ref, g_ref = _reference_forward(
        u, x, x_feas, epsilon_pe=epsilon_pe, sigma=sigma, x_dim=x_dim)

    assert L.shape == (N,) and u_grad.shape == (N, 2)
    assert jnp.allclose(L, L_ref, rtol=5e-3, atol=1e-2)
    assert jnp.allclose(u_grad, g_ref, rtol=5e-3, atol=1e-2)

    # ---- bfloat16 path: native-dtype streaming (half the HBM bytes) ---------
    x_bf = x.astype(jnp.bfloat16)
    xf_bf = x_feas.astype(jnp.bfloat16)
    L_bf, g_bf = pessimistic_likelihood_forward(
        u, x_bf, xf_bf, epsilon_pe=epsilon_pe, sigma=sigma, x_dim=x_dim)
    jax.block_until_ready((L_bf, g_bf))

    # Reference on the bf16-rounded values (the kernel upcasts them to f32).
    L_bref, g_bref = _reference_forward(
        u, x_bf.astype(jnp.float32), xf_bf.astype(jnp.float32),
        epsilon_pe=epsilon_pe, sigma=sigma, x_dim=x_dim)
    assert jnp.allclose(L_bf, L_bref, rtol=1e-2, atol=5e-2)
    assert jnp.allclose(g_bf, g_bref, rtol=1e-2, atol=5e-2)

    print("KERNEL_OK")
</pallas_src>

<mosaic_0001>
module attributes {stable_mosaic.version = 11 : i64} {
  func.func @_pessimistic_likelihood_kernel(%arg0: i32, %arg1: i32, %arg2: memref<2x128xf32, #tpu.memory_space<vmem>>, %arg3: memref<128x32xf32, #tpu.memory_space<vmem>>, %arg4: memref<128x32xf32, #tpu.memory_space<vmem>>, %arg5: memref<1x128xf32, #tpu.memory_space<vmem>>, %arg6: memref<2x128xf32, #tpu.memory_space<vmem>>, %arg7: memref<8x128xf32, #tpu.memory_space<vmem>>) attributes {dimension_semantics = [#tpu.dimension_semantics<parallel>, #tpu.dimension_semantics<arbitrary>], iteration_bounds = array<i64: 2, 1>, scalar_prefetch = 0 : i64, scratch_operands = 1 : i64, tpu.core_type = #tpu.core_type<tc>, window_params = [{transform_indices = @transform_0, window_bounds = array<i64: 2, 128>}, {transform_indices = @transform_1, window_bounds = array<i64: 128, 32>}, {transform_indices = @transform_2, window_bounds = array<i64: 128, 32>}, {transform_indices = @transform_3, window_bounds = array<i64: 1, 128>}, {transform_indices = @transform_4, window_bounds = array<i64: 2, 128>}]} {
    %c0_i32 = arith.constant 0 : i32
    %0 = arith.cmpi eq, %arg1, %c0_i32 : i32
    %1 = arith.extui %0 : i1 to i32
    %c0_i32_0 = arith.constant 0 : i32
    %2 = arith.cmpi ne, %1, %c0_i32_0 : i32
    scf.if %2 {
      %cst_11 = arith.constant 0.000000e+00 : f32
      %15 = vector.broadcast %cst_11 : f32 to vector<8x128xf32>
      %c0_12 = arith.constant 0 : index
      %c0_13 = arith.constant 0 : index
      %16 = vector.load %arg7[%c0_12, %c0_13] : memref<8x128xf32, #tpu.memory_space<vmem>>, vector<8x128xf32>
      tpu.vector_store %arg7[%c0_12, %c0_13], %15 {strides = array<i32>} : memref<8x128xf32, #tpu.memory_space<vmem>>, vector<8x128xf32>,
    } else {
    }
    %c0 = arith.constant 0 : index
    %c0_1 = arith.constant 0 : index
    %3 = vector.load %arg3[%c0, %c0_1] : memref<128x32xf32, #tpu.memory_space<vmem>>, vector<128x32xf32>
    %c0_2 = arith.constant 0 : index
    %c0_3 = arith.constant 0 : index
    %4 = vector.load %arg4[%c0_2, %c0_3] : memref<128x32xf32, #tpu.memory_space<vmem>>, vector<128x32xf32>
    %5 = arith.subf %3, %4 : vector<128x32xf32>
    %6 = arith.mulf %5, %5 : vector<128x32xf32>
    %cst = arith.constant 1.000000e+00 : f32
    %7 = vector.broadcast %cst : f32 to vector<8x32xf32>
    %c0_4 = arith.constant 0 : index
    %c0_5 = arith.constant 0 : index
    %8 = vector.load %arg7[%c0_4, %c0_5] : memref<8x128xf32, #tpu.memory_space<vmem>>, vector<8x128xf32>
    %cst_6 = arith.constant dense<0.000000e+00> : vector<8x128xf32>
    %9 = tpu.matmul %7, %6, %cst_6 {dimension_numbers = #tpu.dot_dimension_numbers<[1], [1], [0], [0], [0, 0, 1, 0], [], []>} : vector<8x32xf32>, vector<128x32xf32>, vector<8x128xf32> -> vector<8x128xf32>
    %10 = arith.addf %8, %9 : vector<8x128xf32>
    %c0_7 = arith.constant 0 : index
    %c0_8 = arith.constant 0 : index
    %11 = vector.load %arg7[%c0_7, %c0_8] : memref<8x128xf32, #tpu.memory_space<vmem>>, vector<8x128xf32>
    tpu.vector_store %arg7[%c0_7, %c0_8], %10 {strides = array<i32>} : memref<8x128xf32, #tpu.memory_space<vmem>>, vector<8x128xf32>,
    %c0_i32_9 = arith.constant 0 : i32
    %12 = arith.cmpi eq, %arg1, %c0_i32_9 : i32
    %13 = arith.extui %12 : i1 to i32
    %c0_i32_10 = arith.constant 0 : i32
    %14 = arith.cmpi ne, %13, %c0_i32_10 : i32
    scf.if %14 {
      %c0_11 = arith.constant 0 : index
      %c0_12 = arith.constant 0 : index
      %15 = vector.load %arg7[%c0_11, %c0_12] : memref<8x128xf32, #tpu.memory_space<vmem>>, vector<1x128xf32>
      %16 = math.sqrt %15 : vector<1x128xf32>
      %c0_13 = arith.constant 0 : index
      %c0_14 = arith.constant 0 : index
      %17 = vector.load %arg2[%c0_13, %c0_14] : memref<2x128xf32, #tpu.memory_space<vmem>>, vector<1x128xf32>
      %c1 = arith.constant 1 : index
      %c0_15 = arith.constant 0 : index
      %18 = vector.load %arg2[%c1, %c0_15] : memref<2x128xf32, #tpu.memory_space<vmem>>, vector<1x128xf32>
      %cst_16 = arith.constant 1.000000e-01 : f32
      %19 = vector.broadcast %cst_16 : f32 to vector<1x128xf32>
      %20 = arith.addf %18, %19 : vector<1x128xf32>
      %cst_17 = arith.constant 3.200000e+01 : f32
      %21 = vector.broadcast %cst_17 : f32 to vector<1x128xf32>
      %22 = arith.mulf %21, %17 : vector<1x128xf32>
      %23 = arith.mulf %22, %17 : vector<1x128xf32>
      %cst_18 = arith.constant 2.500010e-01 : f32
      %24 = vector.broadcast %cst_18 : f32 to vector<1x128xf32>
      %25 = arith.subf %24, %23 : vector<1x128xf32>
      %26 = arith.mulf %18, %18 : vector<1x128xf32>
      %27 = arith.subf %25, %26 : vector<1x128xf32>
      %cst_19 = arith.constant 0.0322580636 : f32
      %28 = vector.broadcast %cst_19 : f32 to vector<1x128xf32>
      %29 = arith.mulf %27, %28 : vector<1x128xf32>
      %30 = math.sqrt %29 : vector<1x128xf32>
      %cst_20 = arith.constant 5.65685415 : f32
      %31 = vector.broadcast %cst_20 : f32 to vector<1x128xf32>
      %32 = arith.mulf %31, %17 : vector<1x128xf32>
      %33 = arith.addf %16, %32 : vector<1x128xf32>
      %34 = tpu.reciprocal %20 {approx = true} : vector<1x128xf32> -> vector<1x128xf32>
      %35 = arith.mulf %20, %34 : vector<1x128xf32>
      %cst_21 = arith.constant 2.000000e+00 : f32
      %36 = vector.broadcast %cst_21 : f32 to vector<1x128xf32>
      %37 = arith.subf %36, %35 : vector<1x128xf32>
      %38 = arith.mulf %34, %37 : vector<1x128xf32>
      %cst_22 = arith.constant 1.000000e-01 : f32
      %39 = vector.broadcast %cst_22 : f32 to vector<1x128xf32>
      %40 = arith.addf %30, %39 : vector<1x128xf32>
      %41 = arith.mulf %30, %40 : vector<1x128xf32>
      %42 = tpu.reciprocal %41 {approx = true} : vector<1x128xf32> -> vector<1x128xf32>
      %43 = arith.mulf %41, %42 : vector<1x128xf32>
      %cst_23 = arith.constant 2.000000e+00 : f32
      %44 = vector.broadcast %cst_23 : f32 to vector<1x128xf32>
      %45 = arith.subf %44, %43 : vector<1x128xf32>
      %46 = arith.mulf %42, %45 : vector<1x128xf32>
      %47 = arith.mulf %38, %38 : vector<1x128xf32>
      %48 = math.log %20 : vector<1x128xf32>
      %cst_24 = arith.constant 0.000000e+00 : f32
      %49 = vector.broadcast %cst_24 : f32 to vector<1x128xf32>
      %50 = arith.subf %49, %48 : vector<1x128xf32>
      %51 = arith.mulf %33, %33 : vector<1x128xf32>
      %cst_25 = arith.constant 5.000000e-01 : f32
      %52 = vector.broadcast %cst_25 : f32 to vector<1x128xf32>
      %53 = arith.mulf %52, %51 : vector<1x128xf32>
      %54 = arith.mulf %53, %47 : vector<1x128xf32>
      %55 = arith.subf %50, %54 : vector<1x128xf32>
      %cst_26 = arith.constant 1.000000e-01 : f32
      %56 = vector.broadcast %cst_26 : f32 to vector<1x128xf32>
      %57 = arith.addf %30, %56 : vector<1x128xf32>
      %58 = math.log %57 : vector<1x128xf32>
      %cst_27 = arith.constant 3.100000e+01 : f32
      %59 = vector.broadcast %cst_27 : f32 to vector<1x128xf32>
      %60 = arith.mulf %59, %58 : vector<1x128xf32>
      %61 = arith.subf %55, %60 : vector<1x128xf32>
      %c0_28 = arith.constant 0 : index
      %c0_29 = arith.constant 0 : index
      %62 = vector.load %arg5[%c0_28, %c0_29] : memref<1x128xf32, #tpu.memory_space<vmem>>, vector<1x128xf32>
      tpu.vector_store %arg5[%c0_28, %c0_29], %61 {strides = array<i32>} : memref<1x128xf32, #tpu.memory_space<vmem>>, vector<1x128xf32>,
      %cst_30 = arith.constant -5.65685415 : f32
      %63 = vector.broadcast %cst_30 : f32 to vector<1x128xf32>
      %64 = arith.mulf %63, %33 : vector<1x128xf32>
      %65 = arith.mulf %64, %47 : vector<1x128xf32>
      %cst_31 = arith.constant 3.200000e+01 : f32
      %66 = vector.broadcast %cst_31 : f32 to vector<1x128xf32>
      %67 = arith.mulf %66, %17 : vector<1x128xf32>
      %68 = arith.mulf %67, %46 : vector<1x128xf32>
      %69 = arith.subf %65, %68 : vector<1x128xf32>
      %c0_32 = arith.constant 0 : index
      %c0_33 = arith.constant 0 : index
      %70 = vector.load %arg6[%c0_32, %c0_33] : memref<2x128xf32, #tpu.memory_space<vmem>>, vector<1x128xf32>
      tpu.vector_store %arg6[%c0_32, %c0_33], %69 {strides = array<i32>} : memref<2x128xf32, #tpu.memory_space<vmem>>, vector<1x128xf32>,
      %cst_34 = arith.constant 0.000000e+00 : f32
      %71 = vector.broadcast %cst_34 : f32 to vector<1x128xf32>
      %72 = arith.subf %71, %38 : vector<1x128xf32>
      %73 = arith.mulf %33, %33 : vector<1x128xf32>
      %74 = arith.mulf %47, %38 : vector<1x128xf32>
      %75 = arith.mulf %73, %74 : vector<1x128xf32>
      %76 = arith.addf %72, %75 : vector<1x128xf32>
      %77 = arith.mulf %18, %46 : vector<1x128xf32>
      %78 = arith.addf %76, %77 : vector<1x128xf32>
      %c1_35 = arith.constant 1 : index
      %c0_36 = arith.constant 0 : index
      %79 = vector.load %arg6[%c1_35, %c0_36] : memref<2x128xf32, #tpu.memory_space<vmem>>, vector<1x128xf32>
      tpu.vector_store %arg6[%c1_35, %c0_36], %78 {strides = array<i32>} : memref<2x128xf32, #tpu.memory_space<vmem>>, vector<1x128xf32>,
    } else {
    }
    return
  }
  func.func @transform_0(%arg0: i32, %arg1: i32) -> (i32, i32) {
    %c0_i32 = arith.constant 0 : i32
    %c0_i32_0 = arith.constant 0 : i32
    return %c0_i32, %arg0 : i32, i32
  }
  func.func @transform_1(%arg0: i32, %arg1: i32) -> (i32, i32) {
    %c0_i32 = arith.constant 0 : i32
    return %arg0, %arg1 : i32, i32
  }
  func.func @transform_2(%arg0: i32, %arg1: i32) -> (i32, i32) {
    %c0_i32 = arith.constant 0 : i32
    return %arg0, %arg1 : i32, i32
  }
  func.func @transform_3(%arg0: i32, %arg1: i32) -> (i32, i32) {
    %c0_i32 = arith.constant 0 : i32
    %c0_i32_0 = arith.constant 0 : i32
    return %c0_i32, %arg0 : i32, i32
  }
  func.func @transform_4(%arg0: i32, %arg1: i32) -> (i32, i32) {
    %c0_i32 = arith.constant 0 : i32
    %c0_i32_0 = arith.constant 0 : i32
    return %c0_i32, %arg0 : i32, i32
  }
}

</mosaic_0001>

<llo_original>
// kernel: tpu_custom_call.1
$region0: #{tpu_custom_call.1}
  #allocation0 [shape = 'u32[]', space=smem, size = 0x4, offset = 0x4, fixed_abs, tag = 'smem constant byte address 0x4 - core index']
  #allocation1 [shape = 'u32[72,128]{1,0:T(1,128)}', space=vmem, size = 0x9000, scoped, tag = 'internal scratch']
  #allocation2 [shape = 'f32[8,128]{1,0:T(8,128)}', space=vmem, size = 0x1000, scoped, tag = 'scratch operand']
  %s0 = inlined_call_operand.vmem [shape: f32[2,200], index: 0, kind: input, shape index: {}]
  %s1 = inlined_call_operand.vmem [shape: f32[200,32], index: 1, kind: input, shape index: {}]
  %s2 = inlined_call_operand.vmem [shape: f32[200,32], index: 2, kind: input, shape index: {}]
  %s3 = inlined_call_operand.hbm [shape: f32[1,256], index: 3, kind: output, shape index: {0}]
  %s4 = inlined_call_operand.hbm [shape: f32[2,256], index: 4, kind: output, shape index: {1}]
  %5 = xla_tuple %s3, %s4
  %s6 = sld [smem:[#allocation0]]
  $region61: #{tpu_custom_call.1} parent=0
    _
  %s8 = ssub.s32 1, %s6
  %s9 = scalar_select 0, %s8, %s6
  $region1: #{tpu_custom_call.1} parent=0
    #allocation3 [shape = 'u8[1024]{0}', space=vmem, size = 0x400, scoped, tag = 'output window, operand 0']
    #allocation4 [shape = 's32[2]{0}', space=sflag, size = 0x8, scoped, tag = 'scoped memory for tpu_custom_call.1']
    #allocation5 [shape = 'u8[2048]{0}', space=vmem, size = 0x800, scoped, tag = 'output window, operand 1']
    #allocation6 [shape = 's32[2]{0}', space=sflag, size = 0x8, scoped, tag = 'scoped memory for tpu_custom_call.1']
    %10 = vsyncpa [#allocation4], 0
    %s11 = scalar_lea.sflag [#allocation4], 1
    %12 = vsyncpa %s11, 0
    %13 = vsyncpa [#allocation6], 0
    %s14 = scalar_lea.sflag [#allocation6], 1
    %15 = vsyncpa %s14, 0
    loop: start=0, step=1, limit=4
    $region2: #{tpu_custom_call.1} parent=1 // loop_pre_header
      _
    $region3: #{tpu_custom_call.1} parent=1 // loop_header
      %s17 = sphi 0, %s21
      %p18 = scmp.ge.s32.totalorder %s17, 4
      %s24 = sphi 0, %s36
      %s25 = sphi 0, %s32
      %s26 = sphi 0, %s24
      %s27 = sphi 0, %s25
      %s28 = sphi 0, %s26
      %s29 = sphi 0, %s27
      %s39 = sphi 0, %s41
      %s42 = sphi 0, %s39
      %s43 = sphi 0, %s42
      %s59 = sphi 0, %s43
      %s67 = sphi 0, %s69
      %s70 = sphi 0, %s67
      %s71 = sphi 0, %s70
      %s87 = sphi 0, %s71
      %s95 = sphi 0, %s97
      %s98 = sphi 0, %s95
      %s99 = sphi 0, %s98
      %s115 = sphi 0, %s99
      %s121 = sphi 0, %s123
      %s124 = sphi 0, %s121
      %s125 = sphi 0, %s124
      %s141 = sphi 0, %s125
      %s147 = sphi 0, %s149
      %s150 = sphi 0, %s147
      %s151 = sphi 0, %s150
      %s167 = sphi 0, %s151
    $region4: #{tpu_custom_call.1} parent=1 // loop_header_branch
      %20 = sbr.rel (%p18) target = $region8
    $region5: #{tpu_custom_call.1} parent=1 // loop_body
      %s22 = ssub.s32 %s17, 1
      %s23 = ssub.s32 %s17, 2
      %s30 = sadd.s32 1, %s25
      %p31 = scmp.ge.s32.totalorder %s30, 1
      %s32 = scalar_select %p31, 0, %s30
      %s33 = sadd.s32 1, %s24
      %s34 = scalar_select %p31, %s33, %s24
      %p35 = scmp.ge.s32.totalorder %s34, 2
      %s36 = scalar_select %p35, 0, %s34
      %s37 = ssub.s32 %s24, %s36
      %p38 = scmp.eq.s32.totalorder %s37, 0
      %s40 = sadd.s32 %s39, 1
      %s41 = scalar_select %p38, %s39, %s40
      %p44 = pneg %p38
      %p45 = scmp.eq.s32.totalorder %s17, 1
      %p46 = por %p44, %p45
      %p47 = scmp.ne.s32.totalorder %s39, %s42
      %p48 = scmp.eq.s32.totalorder %s17, 0
      %p49 = por %p47, %p48
      %p50 = scmp.ne.s32.totalorder %s39, %s42
      %p51 = scmp.eq.s32.totalorder %s22, 1
      %p52 = por %p50, %p51
      %p53 = scmp.ne.s32.totalorder %s42, %s43
      %p54 = scmp.eq.s32.totalorder %s22, 0
      %p55 = por %p53, %p54
      %p56 = scmp.ne.s32.totalorder %s42, %s43
      %p57 = scmp.eq.s32.totalorder %s23, 1
      %p58 = por %p56, %p57
      %p60 = scmp.ne.s32.totalorder %s43, %s59
      %p61 = scmp.eq.s32.totalorder %s23, 0
      %p62 = por %p60, %p61
      %s63 = ssub.s32 %s24, %s36
      %s64 = ssub.s32 %s25, %s32
      %s65 = sor.u32 %s63, %s64
      %p66 = scmp.eq.s32.totalorder %s65, 0
      %s68 = sadd.s32 %s67, 1
      %s69 = scalar_select %p66, %s67, %s68
      %p72 = pneg %p66
      %p73 = scmp.eq.s32.totalorder %s17, 1
      %p74 = por %p72, %p73
      %p75 = scmp.ne.s32.totalorder %s67, %s70
      %p76 = scmp.eq.s32.totalorder %s17, 0
      %p77 = por %p75, %p76
      %p78 = scmp.ne.s32.totalorder %s67, %s70
      %p79 = scmp.eq.s32.totalorder %s22, 1
      %p80 = por %p78, %p79
      %p81 = scmp.ne.s32.totalorder %s70, %s71
      %p82 = scmp.eq.s32.totalorder %s22, 0
      %p83 = por %p81, %p82
      %p84 = scmp.ne.s32.totalorder %s70, %s71
      %p85 = scmp.eq.s32.totalorder %s23, 1
      %p86 = por %p84, %p85
      %p88 = scmp.ne.s32.totalorder %s71, %s87
      %p89 = scmp.eq.s32.totalorder %s23, 0
      %p90 = por %p88, %p89
      %s91 = ssub.s32 %s24, %s36
      %s92 = ssub.s32 %s25, %s32
      %s93 = sor.u32 %s91, %s92
      %p94 = scmp.eq.s32.totalorder %s93, 0
      %s96 = sadd.s32 %s95, 1
      %s97 = scalar_select %p94, %s95, %s96
      %p100 = pneg %p94
      %p101 = scmp.eq.s32.totalorder %s17, 1
      %p102 = por %p100, %p101
      %p103 = scmp.ne.s32.totalorder %s95, %s98
      %p104 = scmp.eq.s32.totalorder %s17, 0
      %p105 = por %p103, %p104
      %p106 = scmp.ne.s32.totalorder %s95, %s98
      %p107 = scmp.eq.s32.totalorder %s22, 1
      %p108 = por %p106, %p107
      %p109 = scmp.ne.s32.totalorder %s98, %s99
      %p110 = scmp.eq.s32.totalorder %s22, 0
      %p111 = por %p109, %p110
      %p112 = scmp.ne.s32.totalorder %s98, %s99
      %p113 = scmp.eq.s32.totalorder %s23, 1
      %p114 = por %p112, %p113
      %p116 = scmp.ne.s32.totalorder %s99, %s115
      %p117 = scmp.eq.s32.totalorder %s23, 0
      %p118 = por %p116, %p117
      %s119 = ssub.s32 %s24, %s36
      %p120 = scmp.eq.s32.totalorder %s119, 0
      %s122 = sadd.s32 %s121, 1
      %s123 = scalar_select %p120, %s121, %s122
      %p126 = pneg %p120
      %p127 = scmp.eq.s32.totalorder %s17, 1
      %p128 = por %p126, %p127
      %p129 = scmp.ne.s32.totalorder %s121, %s124
      %p130 = scmp.eq.s32.totalorder %s17, 0
      %p131 = por %p129, %p130
      %p132 = scmp.ne.s32.totalorder %s121, %s124
      %p133 = scmp.eq.s32.totalorder %s22, 1
      %p134 = por %p132, %p133
      %p135 = scmp.ne.s32.totalorder %s124, %s125
      %p136 = scmp.eq.s32.totalorder %s22, 0
      %p137 = por %p135, %p136
      %p138 = scmp.ne.s32.totalorder %s124, %s125
      %p139 = scmp.eq.s32.totalorder %s23, 1
      %p140 = por %p138, %p139
      %p142 = scmp.ne.s32.totalorder %s125, %s141
      %p143 = scmp.eq.s32.totalorder %s23, 0
      %p144 = por %p142, %p143
      %s145 = ssub.s32 %s24, %s36
      %p146 = scmp.eq.s32.totalorder %s145, 0
      %s148 = sadd.s32 %s147, 1
      %s149 = scalar_select %p146, %s147, %s148
      %p152 = pneg %p146
      %p153 = scmp.eq.s32.totalorder %s17, 1
      %p154 = por %p152, %p153
      %p155 = scmp.ne.s32.totalorder %s147, %s150
      %p156 = scmp.eq.s32.totalorder %s17, 0
      %p157 = por %p155, %p156
      %p158 = scmp.ne.s32.totalorder %s147, %s150
      %p159 = scmp.eq.s32.totalorder %s22, 1
      %p160 = por %p158, %p159
      %p161 = scmp.ne.s32.totalorder %s150, %s151
      %p162 = scmp.eq.s32.totalorder %s22, 0
      %p163 = por %p161, %p162
      %p164 = scmp.ne.s32.totalorder %s150, %s151
      %p165 = scmp.eq.s32.totalorder %s23, 1
      %p166 = por %p164, %p165
      %p168 = scmp.ne.s32.totalorder %s151, %s167
      %p169 = scmp.eq.s32.totalorder %s23, 0
      %p170 = por %p168, %p169
      %p171 = scmp.le.s32.totalorder 1, %s17
      %p172 = scmp.lt.s32.totalorder %s17, 3
      %p173 = pnand %p171, %p172
      %p174 = pneg %p173
      // Predicated region
      $region9: #{tpu_custom_call.1} parent=5 // pred_check
        _
      $region10: #{tpu_custom_call.1} parent=5 // pred_check_branch
        %176 = sbr.rel (%p173) target = $region12
      $region11: #{tpu_custom_call.1} parent=5 // pred_region
        %s177 = ssub.s32 %s17, 1
      $region12: #{tpu_custom_call.1} parent=5 // pred_fallthru
        _
      %p178 = scmp.lt.s32.totalorder %s17, 2
      // Predicated region
      $region13: #{tpu_custom_call.1} parent=5 // pred_check
        %p179 = pneg %p178
      $region14: #{tpu_custom_call.1} parent=5 // pred_check_branch
        %181 = sbr.rel (%p179) target = $region16
      $region15: #{tpu_custom_call.1} parent=5 // pred_region
        // Predicated region
        $region17: #{tpu_custom_call.1} parent=15 // pred_check
          %p182 = pneg %p49
        $region18: #{tpu_custom_call.1} parent=15 // pred_check_branch
          %184 = sbr.rel (%p182) target = $region20
        $region19: #{tpu_custom_call.1} parent=15 // pred_region
          %p185 = scmp.lt.s32.totalorder %s24, 1
          %s186 = scalar_select %p185, %s24, 1
          %s187 = smul.addr %s186, 2
          %s188 = scalar_lea.vmem %s0, %s187
        $region20: #{tpu_custom_call.1} parent=15 // pred_fallthru
          _
        // Predicated region
        $region21: #{tpu_custom_call.1} parent=15 // pred_check
          %p189 = pneg %p77
        $region22: #{tpu_custom_call.1} parent=15 // pred_check_branch
          %191 = sbr.rel (%p189) target = $region24
        $region23: #{tpu_custom_call.1} parent=15 // pred_region
          %s192 = smul.u32 16, %s24
          %s193 = ssub.s32 25, %s192
          %p194 = scmp.lt.s32.totalorder %s193, 16
          %s195 = scalar_select %p194, %s193, 16
          %s196 = smul.u32 8, %s195
          %p197 = scmp.lt.s32.totalorder %s192, 24
          %s198 = scalar_select %p197, %s192, 24
          %p199 = scmp.lt.s32.totalorder %s25, 0
          %s200 = scalar_select %p199, %s25, 0
          %s201 = sadd.s32 %s200, %s198
          %s202 = smul.addr %s201, 8
          %s203 = scalar_lea.vmem %s1, %s202
          %s204 = smul.u32 16, %s24
          %s205 = ssub.s32 25, %s204
          %p206 = scmp.lt.s32.totalorder %s205, 16
          %s207 = scalar_select %p206, %s205, 16
          %s208 = smul.u32 8, %s207
        $region24: #{tpu_custom_call.1} parent=15 // pred_fallthru
          _
        // Predicated region
        $region25: #{tpu_custom_call.1} parent=15 // pred_check
          %p209 = pneg %p105
        $region26: #{tpu_custom_call.1} parent=15 // pred_check_branch
          %211 = sbr.rel (%p209) target = $region28
        $region27: #{tpu_custom_call.1} parent=15 // pred_region
          %s212 = smul.u32 16, %s24
          %s213 = ssub.s32 25, %s212
          %p214 = scmp.lt.s32.totalorder %s213, 16
          %s215 = scalar_select %p214, %s213, 16
          %s216 = smul.u32 8, %s215
          %p217 = scmp.lt.s32.totalorder %s212, 24
          %s218 = scalar_select %p217, %s212, 24
          %p219 = scmp.lt.s32.totalorder %s25, 0
          %s220 = scalar_select %p219, %s25, 0
          %s221 = sadd.s32 %s220, %s218
          %s222 = smul.addr %s221, 8
          %s223 = scalar_lea.vmem %s2, %s222
          %s224 = smul.u32 16, %s24
          %s225 = ssub.s32 25, %s224
          %p226 = scmp.lt.s32.totalorder %s225, 16
          %s227 = scalar_select %p226, %s225, 16
          %s228 = smul.u32 8, %s227
        $region28: #{tpu_custom_call.1} parent=15 // pred_fallthru
          _
      $region16: #{tpu_custom_call.1} parent=5 // pred_fallthru
        _
      %p229 = scmp.le.s32.totalorder 1, %s17
      %p230 = scmp.lt.s32.totalorder %s17, 3
      %p231 = pnand %p229, %p230
      %p232 = pneg %p231
      // Predicated region
      $region29: #{tpu_custom_call.1} parent=5 // pred_check
        _
      $region30: #{tpu_custom_call.1} parent=5 // pred_check_branch
        %234 = sbr.rel (%p231) target = $region32
      $region31: #{tpu_custom_call.1} parent=5 // pred_region
        %s235 = ssub.s32 %s17, 1
        %p236 = scmp.lt.s32.totalorder %s26, 1
        %s237 = scalar_select %p236, %s26, 1
        %s238 = smul.addr %s237, 2
        %s239 = scalar_lea.vmem %s0, %s238
        %p240 = pneg %p55
        %p241 = pneg %p52
        %s242 = smul.u32 16, %s26
        %s243 = ssub.s32 25, %s242
        %p244 = scmp.lt.s32.totalorder %s243, 16
        %s245 = scalar_select %p244, %s243, 16
        %s246 = smul.u32 8, %s245
        %p247 = scmp.lt.s32.totalorder %s242, 24
        %s248 = scalar_select %p247, %s242, 24
        %p249 = scmp.lt.s32.totalorder %s27, 0
        %s250 = scalar_select %p249, %s27, 0
        %s251 = sadd.s32 %s250, %s248
        %s252 = smul.addr %s251, 8
        %s253 = scalar_lea.vmem %s1, %s252
        %p254 = pneg %p83
        %p255 = pneg %p80
        %s256 = smul.u32 16, %s26
        %s257 = ssub.s32 25, %s256
        %p258 = scmp.lt.s32.totalorder %s257, 16
        %s259 = scalar_select %p258, %s257, 16
        %s260 = smul.u32 8, %s259
        %p261 = scmp.lt.s32.totalorder %s256, 24
        %s262 = scalar_select %p261, %s256, 24
        %p263 = scmp.lt.s32.totalorder %s27, 0
        %s264 = scalar_select %p263, %s27, 0
        %s265 = sadd.s32 %s264, %s262
        %s266 = smul.addr %s265, 8
        %s267 = scalar_lea.vmem %s2, %s266
        %p268 = pneg %p111
        %p269 = pneg %p108
        %p270 = pneg %p137
        %p271 = pneg %p134
        %s272 = sand.u32 %s124, 1
        %s273 = scalar_lea.sflag [#allocation4], %s272
        %s274 = sand.u32 %s124, 1
        %s275 = scalar_lea.vmem [#allocation3], %s274
        %p276 = pneg %p163
        %p277 = pneg %p160
        %s278 = sand.u32 %s150, 1
        %s279 = scalar_lea.sflag [#allocation6], %s278
        %s280 = sand.u32 %s150, 1
        %s281 = smul.addr %s280, 2
        %s282 = scalar_lea.vmem [#allocation5], %s281
        %p283 = scmp.lt.s32.totalorder %s26, 1
        %s284 = scalar_select %p283, %s26, 1
        %s285 = smul.addr %s284, 2
        %s286 = scalar_lea.vmem %s0, %s285
        %s287 = smul.u32 16, %s26
        %s288 = ssub.s32 25, %s287
        %p289 = scmp.lt.s32.totalorder %s288, 16
        %s290 = scalar_select %p289, %s288, 16
        %s291 = smul.u32 8, %s290
        %p292 = scmp.lt.s32.totalorder %s287, 24
        %s293 = scalar_select %p292, %s287, 24
        %p294 = scmp.lt.s32.totalorder %s27, 0
        %s295 = scalar_select %p294, %s27, 0
        %s296 = sadd.s32 %s295, %s293
        %s297 = smul.addr %s296, 8
        %s298 = scalar_lea.vmem %s1, %s297
        %s299 = smul.u32 16, %s26
        %s300 = ssub.s32 25, %s299
        %p301 = scmp.lt.s32.totalorder %s300, 16
        %s302 = scalar_select %p301, %s300, 16
        %s303 = smul.u32 8, %s302
        %s304 = smul.u32 16, %s26
        %s305 = ssub.s32 25, %s304
        %p306 = scmp.lt.s32.totalorder %s305, 16
        %s307 = scalar_select %p306, %s305, 16
        %s308 = smul.u32 8, %s307
        %p309 = scmp.lt.s32.totalorder %s304, 24
        %s310 = scalar_select %p309, %s304, 24
        %p311 = scmp.lt.s32.totalorder %s27, 0
        %s312 = scalar_select %p311, %s27, 0
        %s313 = sadd.s32 %s312, %s310
        %s314 = smul.addr %s313, 8
        %s315 = scalar_lea.vmem %s2, %s314
        %s316 = smul.u32 16, %s26
        %s317 = ssub.s32 25, %s316
        %p318 = scmp.lt.s32.totalorder %s317, 16
        %s319 = scalar_select %p318, %s317, 16
        %s320 = smul.u32 8, %s319
        %p321 = scmp.eq.s32.totalorder %s27, 0
        // Predicated region
        $region33: #{tpu_custom_call.1} parent=31 // pred_check
          %p322 = pneg %p321
        $region34: #{tpu_custom_call.1} parent=31 // pred_check_branch
          %324 = sbr.rel (%p322) target = $region36
        $region35: #{tpu_custom_call.1} parent=31 // pred_region
          %325 = vst [vmem:[#allocation2] sm:$0xff] 0.0
        $region36: #{tpu_custom_call.1} parent=31 // pred_fallthru
          _
        %v326 = vld [vmem:[%s298] sm:$0xff]
        %v327 = vld [vmem:[%s298 + $0x8] sm:$0xff]
        %v328 = vld [vmem:[%s298 + $0x10] sm:$0xff]
        %v329 = vld [vmem:[%s298 + $0x18] sm:$0xff]
        %v330 = vld [vmem:[%s298 + $0x20] sm:$0xff]
        %v331 = vld [vmem:[%s298 + $0x28] sm:$0xff]
        %v332 = vld [vmem:[%s298 + $0x30] sm:$0xff]
        %v333 = vld [vmem:[%s298 + $0x38] sm:$0xff]
        %v334 = vld [vmem:[%s298 + $0x40] sm:$0xff]
        %v335 = vld [vmem:[%s298 + $0x48] sm:$0xff]
        %v336 = vld [vmem:[%s298 + $0x50] sm:$0xff]
        %v337 = vld [vmem:[%s298 + $0x58] sm:$0xff]
        %v338 = vld [vmem:[%s298 + $0x60] sm:$0xff]
        %v339 = vld [vmem:[%s298 + $0x68] sm:$0xff]
        %v340 = vld [vmem:[%s298 + $0x70] sm:$0xff]
        %v341 = vld [vmem:[%s298 + $0x78] sm:$0xff]
        %v342 = vld [vmem:[%s315] sm:$0xff]
        %v343 = vld [vmem:[%s315 + $0x8] sm:$0xff]
        %v344 = vld [vmem:[%s315 + $0x10] sm:$0xff]
        %v345 = vld [vmem:[%s315 + $0x18] sm:$0xff]
        %v346 = vld [vmem:[%s315 + $0x20] sm:$0xff]
        %v347 = vld [vmem:[%s315 + $0x28] sm:$0xff]
        %v348 = vld [vmem:[%s315 + $0x30] sm:$0xff]
        %v349 = vld [vmem:[%s315 + $0x38] sm:$0xff]
        %v350 = vld [vmem:[%s315 + $0x40] sm:$0xff]
        %v351 = vld [vmem:[%s315 + $0x48] sm:$0xff]
        %v352 = vld [vmem:[%s315 + $0x50] sm:$0xff]
        %v353 = vld [vmem:[%s315 + $0x58] sm:$0xff]
        %v354 = vld [vmem:[%s315 + $0x60] sm:$0xff]
        %v355 = vld [vmem:[%s315 + $0x68] sm:$0xff]
        %v356 = vld [vmem:[%s315 + $0x70] sm:$0xff]
        %v357 = vld [vmem:[%s315 + $0x78] sm:$0xff]
        %v358 = vsub.f32 %v326, %v342
        %v359 = vsub.f32 %v327, %v343
        %v360 = vsub.f32 %v328, %v344
        %v361 = vsub.f32 %v329, %v345
        %v362 = vsub.f32 %v330, %v346
        %v363 = vsub.f32 %v331, %v347
        %v364 = vsub.f32 %v332, %v348
        %v365 = vsub.f32 %v333, %v349
        %v366 = vsub.f32 %v334, %v350
        %v367 = vsub.f32 %v335, %v351
        %v368 = vsub.f32 %v336, %v352
        %v369 = vsub.f32 %v337, %v353
        %v370 = vsub.f32 %v338, %v354
        %v371 = vsub.f32 %v339, %v355
        %v372 = vsub.f32 %v340, %v356
        %v373 = vsub.f32 %v341, %v357
        %v374 = vmul.f32 %v358, %v358
        %v375 = vmul.f32 %v359, %v359
        %v376 = vmul.f32 %v360, %v360
        %v377 = vmul.f32 %v361, %v361
        %v378 = vmul.f32 %v362, %v362
        %v379 = vmul.f32 %v363, %v363
        %v380 = vmul.f32 %v364, %v364
        %v381 = vmul.f32 %v365, %v365
        %v382 = vmul.f32 %v366, %v366
        %v383 = vmul.f32 %v367, %v367
        %v384 = vmul.f32 %v368, %v368
        %v385 = vmul.f32 %v369, %v369
        %v386 = vmul.f32 %v370, %v370
        %v387 = vmul.f32 %v371, %v371
        %v388 = vmul.f32 %v372, %v372
        %v389 = vmul.f32 %v373, %v373
        %v390 = vld [vmem:[#allocation2] sm:$0xff]
        %vm391 = vcmask 261120
        %v393 = vsel %vm391, 1.0, 0
        %v396 = vsel %vm391, %v374, 0
        %v399 = vsel %vm391, %v375, 0
        %v402 = vsel %vm391, %v376, 0
        %v405 = vsel %vm391, %v377, 0
        %v408 = vsel %vm391, %v378, 0
        %v411 = vsel %vm391, %v379, 0
        %v414 = vsel %vm391, %v380, 0
        %v417 = vsel %vm391, %v381, 0
        %v420 = vsel %vm391, %v382, 0
        %v423 = vsel %vm391, %v383, 0
        %v426 = vsel %vm391, %v384, 0
        %v429 = vsel %vm391, %v385, 0
        %v432 = vsel %vm391, %v386, 0
        %v435 = vsel %vm391, %v387, 0
        %v438 = vsel %vm391, %v388, 0
        %v441 = vsel %vm391, %v389, 0
        %443 = vmatpush.xpose.msra.mxu0 %v441
        %444 = vmatpush.xpose.msra.mxu0 %v438
        %445 = vmatpush.xpose.msra.mxu0 %v435
        %446 = vmatpush.xpose.msra.mxu0 %v432
        %447 = vmatpush.xpose.msra.mxu0 %v429
        %448 = vmatpush.xpose.msra.mxu0 %v426
        %449 = vmatpush.xpose.msra.mxu0 %v423
        %450 = vmatpush.xpose.msra.mxu0 %v420
        %451 = vmatpush.xpose.msra.mxu0 %v417
        %452 = vmatpush.xpose.msra.mxu0 %v414
        %453 = vmatpush.xpose.msra.mxu0 %v411
        %454 = vmatpush.xpose.msra.mxu0 %v408
        %455 = vmatpush.xpose.msra.mxu0 %v405
        %456 = vmatpush.xpose.msra.mxu0 %v402
        %457 = vmatpush.xpose.msra.mxu0 %v399
        %458 = vmatpush.xpose.msra.mxu0 %v396
        %459 = vmatmul.f32.gmra.mxu0 %v393
        %v460 = vpop.f32.mrf.mxu0
        %v461 = vadd.f32 0.0, %v460
        %462 = vdwg.mxu0
        %v463 = vadd.f32 %v390, %v461
        %464 = vst [vmem:[#allocation2] sm:$0xff] %v463
        // Predicated region
        $region37: #{tpu_custom_call.1} parent=31 // pred_check
          %p465 = pneg %p321
        $region38: #{tpu_custom_call.1} parent=31 // pred_check_branch
          %467 = sbr.rel (%p465) target = $region40
        $region39: #{tpu_custom_call.1} parent=31 // pred_region
          %v468 = vld [vmem:[#allocation2] sm:$0x1]
          %v469 = vrsqrt.pop %v468
          %v470 = vmul.f32 %v469, %v468
          %v471 = vmul.f32 %v470, %v469
          %v472 = vmul.f32 0.5, %v471
          %v473 = vsub.f32 1.5, %v472
          %v474 = vmul.f32 %v469, %v473
          %v475 = vmul.f32 %v468, %v474
          %vm476 = vcmp.eq.f32.partialorder %v468, inf
          %v477 = vsel %vm476, %v468, %v475
          %vm478 = vcmp.eq.f32.partialorder %v468, 0.0
          %v479 = vand.u32 %v468, 2147483648
          %v480 = vsel %vm478, %v479, %v477
          %v481 = vld [vmem:[%s286] sm:$0x1]
          %v482 = vld [vmem:[%s286 + $0x1] sm:$0x1]
          %v483 = vadd.f32 %v482, 0.1
          %v484 = vmul.f32 %v481, 32.0
          %v485 = vmul.f32 %v484, %v481
          %v486 = vsub.f32 0.250001, %v485
          %v487 = vmul.f32 %v482, %v482
          %v488 = vsub.f32 %v486, %v487
          %v489 = vmul.f32 %v488, 0.032258064
          %v490 = vrsqrt.pop %v489
          %v491 = vmul.f32 %v490, %v489
          %v492 = vmul.f32 %v491, %v490
          %v493 = vmul.f32 0.5, %v492
          %v494 = vsub.f32 1.5, %v493
          %v495 = vmul.f32 %v490, %v494
          %v496 = vmul.f32 %v489, %v495
          %vm497 = vcmp.eq.f32.partialorder %v489, inf
          %v498 = vsel %vm497, %v489, %v496
          %vm499 = vcmp.eq.f32.partialorder %v489, 0.0
          %v500 = vand.u32 %v489, 2147483648
          %v501 = vsel %vm499, %v500, %v498
          %v502 = vmul.f32 %v481, 5.656854
          %v503 = vadd.f32 %v480, %v502
          %v504 = vrcp.pop %v483
          %v505 = vmul.f32 %v483, %v504
          %v506 = vsub.f32 2.0, %v505
          %v507 = vmul.f32 %v504, %v506
          %v508 = vadd.f32 %v501, 0.1
          %v509 = vmul.f32 %v501, %v508
          %v510 = vrcp.pop %v509
          %v511 = vmul.f32 %v509, %v510
          %v512 = vsub.f32 2.0, %v511
          %v513 = vmul.f32 %v510, %v512
          %v514 = vmul.f32 %v507, %v507
          %v515 = vlog2.pop %v483
          %v516 = vmul.f32 %v515, 0.6931472
          %v517 = vsub.f32 0.0, %v516
          %v518 = vmul.f32 %v503, %v503
          %v519 = vmul.f32 %v518, 0.5
          %v520 = vmul.f32 %v519, %v514
          %v521 = vsub.f32 %v517, %v520
          %v522 = vlog2.pop %v508
          %v523 = vmul.f32 %v522, 0.6931472
          %v524 = vmul.f32 %v523, 31.0
          %v525 = vsub.f32 %v521, %v524
          %526 = vst [vmem:[%s275] sm:$0x1] %v525
          %v527 = vmul.f32 %v503, -5.656854
          %v528 = vmul.f32 %v527, %v514
          %v529 = vmul.f32 %v484, %v513
          %v530 = vsub.f32 %v528, %v529
          %531 = vst [vmem:[%s282] sm:$0x1] %v530
          %v532 = vsub.f32 0.0, %v507
          %v533 = vmul.f32 %v514, %v507
          %v534 = vmul.f32 %v518, %v533
          %v535 = vadd.f32 %v532, %v534
          %v536 = vmul.f32 %v482, %v513
          %v537 = vadd.f32 %v535, %v536
          %538 = vst [vmem:[%s282 + $0x1] sm:$0x1] %v537
        $region40: #{tpu_custom_call.1} parent=31 // pred_fallthru
          _
        %s539 = sand.u32 %s124, 1
        %s540 = scalar_lea.sflag [#allocation4], %s539
        %s541 = sand.u32 %s124, 1
        %s542 = scalar_lea.vmem [#allocation3], %s541
        %s543 = sand.u32 %s150, 1
        %s544 = scalar_lea.sflag [#allocation6], %s543
        %s545 = sand.u32 %s150, 1
        %s546 = smul.addr %s545, 2
        %s547 = scalar_lea.vmem [#allocation5], %s546
        // Predicated region
        $region41: #{tpu_custom_call.1} parent=31 // pred_check
          %p548 = pneg %p134
        $region42: #{tpu_custom_call.1} parent=31 // pred_check_branch
          %550 = sbr.rel (%p548) target = $region44
        $region43: #{tpu_custom_call.1} parent=31 // pred_region
          %552 = vsyncadd %s540, 0
          %s553 = scalar_lea.hbm %s3, %s26
          %s555 = sshll.u32 %s542, 4
          %s556 = int_to_ptr.vmem [resolvable:$true] %s555
          %s557 = sshll.u32 %s553, 4
          %s558 = int_to_ptr.hbm [resolvable:$true] %s557
          %560 = dma.vmem_to_hbm [thread:$0]  %s556, 16, %s558, %s540
        $region44: #{tpu_custom_call.1} parent=31 // pred_fallthru
          _
        // Predicated region
        $region45: #{tpu_custom_call.1} parent=31 // pred_check
          %p561 = pneg %p160
        $region46: #{tpu_custom_call.1} parent=31 // pred_check_branch
          %563 = sbr.rel (%p561) target = $region48
        $region47: #{tpu_custom_call.1} parent=31 // pred_region
          %565 = vsyncadd %s544, 0
          %s566 = smul.addr %s26, 2
          %s567 = scalar_lea.hbm %s4, %s566
          %s569 = sshll.u32 %s547, 4
          %s570 = int_to_ptr.vmem [resolvable:$true] %s569
          %s571 = sshll.u32 %s567, 4
          %s572 = int_to_ptr.hbm [resolvable:$true] %s571
          %574 = dma.vmem_to_hbm [thread:$0]  %s570, 32, %s572, %s544
        $region48: #{tpu_custom_call.1} parent=31 // pred_fallthru
          _
      $region32: #{tpu_custom_call.1} parent=5 // pred_fallthru
        _
      %p575 = scmp.le.s32.totalorder 2, %s17
      // Predicated region
      $region49: #{tpu_custom_call.1} parent=5 // pred_check
        %p576 = pneg %p575
      $region50: #{tpu_custom_call.1} parent=5 // pred_check_branch
        %578 = sbr.rel (%p576) target = $region52
      $region51: #{tpu_custom_call.1} parent=5 // pred_region
        %s579 = ssub.s32 %s17, 2
        // Predicated region
        $region53: #{tpu_custom_call.1} parent=51 // pred_check
          %p580 = pneg %p140
        $region54: #{tpu_custom_call.1} parent=51 // pred_check_branch
          %582 = sbr.rel (%p580) target = $region56
        $region55: #{tpu_custom_call.1} parent=51 // pred_region
          %s583 = sand.u32 %s125, 1
          %s584 = scalar_lea.sflag [#allocation4], %s583
          %s585 = sand.u32 %s125, 1
          %s586 = scalar_lea.vmem [#allocation3], %s585
          %588 = dma.done %s584, 16
        $region56: #{tpu_custom_call.1} parent=51 // pred_fallthru
          _
        // Predicated region
        $region57: #{tpu_custom_call.1} parent=51 // pred_check
          %p589 = pneg %p166
        $region58: #{tpu_custom_call.1} parent=51 // pred_check_branch
          %591 = sbr.rel (%p589) target = $region60
        $region59: #{tpu_custom_call.1} parent=51 // pred_region
          %s592 = sand.u32 %s151, 1
          %s593 = scalar_lea.sflag [#allocation6], %s592
          %s594 = sand.u32 %s151, 1
          %s595 = smul.addr %s594, 2
          %s596 = scalar_lea.vmem [#allocation5], %s595
          %598 = dma.done %s593, 32
        $region60: #{tpu_custom_call.1} parent=51 // pred_fallthru
          _
      $region52: #{tpu_custom_call.1} parent=5 // pred_fallthru
        _
    $region6: #{tpu_custom_call.1} parent=1 // loop_footer
      %s21 = sadd.s32 1, %s17
    $region7: #{tpu_custom_call.1} parent=1 // loop_footer_branch
      %16 = sbr.rel target = $region3
    $region8: #{tpu_custom_call.1} parent=1 // loop_exit
      _
    %599 = vsyncpa [#allocation4], 1
    %s600 = scalar_lea.sflag [#allocation4], 1
    %601 = vsyncpa %s600, 1
    %602 = vsyncpa [#allocation6], 1
    %s603 = scalar_lea.sflag [#allocation6], 1
    %604 = vsyncpa %s603, 1

</llo_original>
